<compile_context>
chip_gen: v6e
topology: v6e:2x2x1
jax: 0.10.0
libtpu: 0.0.40
codegen_flags: <defaults>
</compile_context>

<pallas_src>
import jax
import jax.numpy as jnp
from jax import lax
from jax.experimental import pallas as pl
from jax.experimental.pallas import tpu as pltpu

MARGIN = 0.5
EPS = 1e-8
# NOTE: the reference module's `alpha=20` is never used in forward(); the
# exponents (-2, 50) and weight 0.04 are hard-coded there, so we keep them.


def _bin_deviance_kernel(inv_den_ref, xrow_ref, xt_ref, tcol_ref, trow_ref,
                         invp_ref, out_ref):
    """One row-tile of anchors against all N columns.

    inv_den_ref: (1, 1)      SMEM  1 / max(||X||_F^2, eps), hoisted to wrapper
    xrow_ref   : (TM, D_pad) VMEM  this tile's embeddings
    xt_ref     : (D_pad, N)  VMEM  full X^T, resident (Buffered(1)) across grid
    tcol_ref   : (TM, 1)           labels of this tile's anchors
    trow_ref   : (1, N)            all labels (lane-dense)
    invp_ref   : (TM, 1)           exact 1/positive-count per anchor (0 if none)
    out_ref    : (TM, 1)           per-anchor loss for this tile
    """
    tm = out_ref.shape[0]
    n = xt_ref.shape[1]
    start = pl.program_id(0) * tm

    # Gram slab on the MXU: (TM, Dp) @ (Dp, N) -> (TM, N), f32 accumulation.
    gram = jnp.dot(xrow_ref[...], xt_ref[...],
                   preferred_element_type=jnp.float32)
    sim = gram * inv_den_ref[0, 0]                              # (TM, N) f32

    # Label / diagonal masks (diag via broadcast iota compare, no int32 slab).
    same = tcol_ref[...] == trow_ref[...]                       # (TM, N)
    col_g = lax.broadcasted_iota(jnp.int32, (1, n), 1)          # (1, N)
    row_g = start + lax.broadcasted_iota(jnp.int32, (tm, 1), 0) # (TM, 1)
    pos_mask = jnp.logical_and(same, col_g != row_g)            # same label, j != i

    # Min positive similarity per anchor (== sorted pos_pair[0] in the reference).
    min_pos = jnp.min(jnp.where(pos_mask, sim, jnp.inf), axis=1, keepdims=True)

    # Fused, numerically-stable softplus: one exp + one log1p over a single
    # (TM, N) slab covers both the -2*(sim-m) and 50*(sim-m) branches.
    dlt = sim - MARGIN
    z = dlt * jnp.where(same, -2.0, 50.0)
    terms = jnp.maximum(z, 0.0) + jnp.log1p(jnp.exp(-jnp.abs(z)))

    # Positive mean: sum in-kernel, exact reciprocal of the count precomputed
    # in the wrapper (0 for singleton classes -> pos_loss 0).
    pos_sum = jnp.sum(jnp.where(pos_mask, terms, 0.0), axis=1, keepdims=True)
    pos_loss = pos_sum * invp_ref[...]

    # Negative mean over the hard-negative selection (exact division).
    sel = jnp.logical_and(jnp.logical_not(same), sim > (min_pos - 0.05))
    neg_cnt = jnp.sum(sel.astype(jnp.float32), axis=1, keepdims=True)
    neg_sum = jnp.sum(jnp.where(sel, terms, 0.0), axis=1, keepdims=True)
    neg_loss = jnp.where(neg_cnt > 0.0,
                         0.04 * neg_sum / jnp.maximum(neg_cnt, 1.0),
                         0.0)

    out_ref[...] = pos_loss + neg_loss


def _pick_tile_rows(n):
    """Row tile: multiple of 8, capped at 128, preferring >= 2 grid steps
    (so the ("parallel",) axis can shard across both v7x TensorCores)."""
    if n % 8 != 0:
        # TODO(synk): ragged batches (n not a multiple of 8) fall back to a
        # single block; add row-validity masking if such sizes matter.
        return n
    for tm in (128, 64, 32, 16, 8):
        if n % tm == 0 and n // tm >= 2:
            return tm
    return n


def bin_deviance_loss(inputs, targets, tile_rows=None):
    """inputs: (N, D) float (f32 or bf16); targets: (N,) int. Returns scalar mean loss."""
    n, d = inputs.shape
    tm = tile_rows if tile_rows is not None else _pick_tile_rows(n)
    assert n % tm == 0 and (tm == n or tm % 8 == 0), (n, tm)
    grid = (n // tm,)

    # Zero-pad D to a multiple of 128 (>=128): padding changes neither the Gram
    # nor the Frobenius norm, and keeps the MXU contraction lanes full.
    d_pad = max(128, ((d + 127) // 128) * 128)
    x_p = inputs if d_pad == d else jnp.pad(inputs, ((0, 0), (0, d_pad - d)))
    x_t = x_p.T                                     # one-time XLA transpose (D_pad, N)

    # Hoisted denominator: ||X||_F * ||X^T||_F == ||X||_F^2 (tiny XLA reduction).
    xf32 = inputs.astype(jnp.float32)
    fro2 = jnp.sum(xf32 * xf32)
    inv_den = (1.0 / jnp.maximum(fro2, EPS)).reshape(1, 1).astype(jnp.float32)

    t32 = targets.astype(jnp.int32)
    t_row = t32.reshape(1, n)
    t_col = t32.reshape(n, 1)
    # Exact per-anchor positive count (same label minus self), computed once.
    pos_cnt = jnp.sum((t_row == t_col), axis=1, keepdims=True).astype(jnp.float32) - 1.0
    inv_pcnt = jnp.where(pos_cnt > 0.0, 1.0 / jnp.maximum(pos_cnt, 1.0), 0.0)

    # Explicit VMEM budget: resident X^T (single-buffered) + double-buffered row
    # tile + ~8 live (TM, N) f32 slabs + small blocks + headroom, capped for v7x.
    itemsize = jnp.dtype(x_p.dtype).itemsize
    vmem_bytes = (d_pad * n * itemsize              # X^T, Buffered(1)
                  + 2 * tm * d_pad * itemsize       # row tile, double-buffered
                  + 8 * tm * n * 4                  # live (TM, N) f32 slabs
                  + 2 * (n * 4 + 4 * tm * 4)        # labels / counts / output
                  + (4 << 20))                      # headroom
    vmem_bytes = int(min(max(vmem_bytes, 16 << 20), 64 << 20))

    per_anchor = pl.pallas_call(
        _bin_deviance_kernel,
        out_shape=jax.ShapeDtypeStruct((n, 1), jnp.float32),
        grid=grid,
        in_specs=[
            pl.BlockSpec(memory_space=pltpu.MemorySpace.SMEM),          # inv_den (1,1)
            pl.BlockSpec((tm, d_pad), lambda i: (i, 0)),                # row tile of X
            pl.BlockSpec((d_pad, n), lambda i: (0, 0),
                         pipeline_mode=pl.Buffered(1)),                 # X^T resident
            pl.BlockSpec((tm, 1), lambda i: (i, 0)),                    # tile labels
            pl.BlockSpec((1, n), lambda i: (0, 0)),                     # all labels
            pl.BlockSpec((tm, 1), lambda i: (i, 0)),                    # 1/pos_cnt
        ],
        out_specs=pl.BlockSpec((tm, 1), lambda i: (i, 0)),
        compiler_params=pltpu.CompilerParams(
            dimension_semantics=("parallel",),
            vmem_limit_bytes=vmem_bytes),
    )(inv_den, x_p, x_t, t_col, t_row, inv_pcnt)
    return jnp.mean(per_anchor)


def _reference(inputs, targets):
    """Pure-JAX re-statement of the PyTorch forward (sort-free equivalent)."""
    x = inputs.astype(jnp.float32)
    n = x.shape[0]
    sim = (x @ x.T) / jnp.maximum(jnp.linalg.norm(x) * jnp.linalg.norm(x.T), EPS)
    same = targets[:, None] == targets[None, :]
    eye = jnp.eye(n, dtype=bool)
    pos_mask = same & ~eye
    neg_mask = ~same
    min_pos = jnp.min(jnp.where(pos_mask, sim, jnp.inf), axis=1, keepdims=True)
    pos_terms = jnp.log(1.0 + jnp.exp(-2.0 * (sim - MARGIN)))
    pos_loss = jnp.sum(jnp.where(pos_mask, pos_terms, 0.0), 1) / jnp.sum(pos_mask, 1)
    sel = neg_mask & (sim > min_pos - 0.05)
    neg_terms = jnp.log(1.0 + jnp.exp(50.0 * (sim - MARGIN)))
    neg_loss = 0.04 * jnp.sum(jnp.where(sel, neg_terms, 0.0), 1) / jnp.sum(sel, 1)
    return jnp.mean(pos_loss + neg_loss)


if __name__ == "__main__":
    key0, key1 = jax.random.split(jax.random.PRNGKey(0))

    # 4 classes x 2 samples each — single row tile (N=8 < 16, grid=(1,)).
    n, d = 8, 32
    x = jax.random.normal(key0, (n, d), dtype=jnp.float32)
    targets = jnp.array([0, 0, 1, 1, 2, 2, 3, 3], dtype=jnp.int32)
    loss = bin_deviance_loss(x, targets)
    jax.block_until_ready(loss)
    ref = _reference(x, targets)
    assert jnp.allclose(loss, ref, rtol=2e-3, atol=1e-3), (float(loss), float(ref))

    # 4 classes x 4 samples each, TM=8 -> 2 grid steps (exercises the parallel
    # row-tiled path, the per-tile diag indexing, and the resident X^T block).
    n2, d2 = 16, 32
    x2 = jax.random.normal(key1, (n2, d2), dtype=jnp.float32)
    t2 = jnp.repeat(jnp.arange(4, dtype=jnp.int32), 4)
    loss2 = bin_deviance_loss(x2, t2)
    jax.block_until_ready(loss2)
    ref2 = _reference(x2, t2)
    assert jnp.allclose(loss2, ref2, rtol=2e-3, atol=1e-3), (float(loss2), float(ref2))

    print("KERNEL_OK")
</pallas_src>

<mosaic_0001>
module attributes {stable_mosaic.version = 11 : i64} {
  func.func @_bin_deviance_kernel(%arg0: i32, %arg1: memref<1x1xf32, #tpu.memory_space<smem>>, %arg2: memref<8x128xf32, #tpu.memory_space<vmem>>, %arg3: memref<128x8xf32, #tpu.memory_space<vmem>>, %arg4: memref<8x1xi32, #tpu.memory_space<vmem>>, %arg5: memref<1x8xi32, #tpu.memory_space<vmem>>, %arg6: memref<8x1xf32, #tpu.memory_space<vmem>>, %arg7: memref<8x1xf32, #tpu.memory_space<vmem>>) attributes {dimension_semantics = [#tpu.dimension_semantics<parallel>], iteration_bounds = array<i64: 1>, scalar_prefetch = 0 : i64, scratch_operands = 0 : i64, tpu.core_type = #tpu.core_type<tc>, window_params = [{transform_indices = @transform_0, window_bounds = array<i64: 1, 1>}, {transform_indices = @transform_1, window_bounds = array<i64: 8, 128>}, {pipeline_mode = #tpu.pipeline_mode<synchronous>, transform_indices = @transform_2, window_bounds = array<i64: 128, 8>}, {transform_indices = @transform_3, window_bounds = array<i64: 8, 1>}, {pipeline_mode = #tpu.pipeline_mode<synchronous>, transform_indices = @transform_4, window_bounds = array<i64: 1, 8>}, {transform_indices = @transform_5, window_bounds = array<i64: 8, 1>}, {transform_indices = @transform_6, window_bounds = array<i64: 8, 1>}]} {
    %c8_i32 = arith.constant 8 : i32
    %0 = arith.muli %arg0, %c8_i32 : i32
    %c0 = arith.constant 0 : index
    %c0_0 = arith.constant 0 : index
    %1 = vector.load %arg2[%c0, %c0_0] : memref<8x128xf32, #tpu.memory_space<vmem>>, vector<8x128xf32>
    %c0_1 = arith.constant 0 : index
    %c0_2 = arith.constant 0 : index
    %2 = vector.load %arg3[%c0_1, %c0_2] : memref<128x8xf32, #tpu.memory_space<vmem>>, vector<128x8xf32>
    %cst = arith.constant dense<0.000000e+00> : vector<8x8xf32>
    %3 = tpu.matmul %1, %2, %cst {dimension_numbers = #tpu.dot_dimension_numbers<[1], [0], [0], [1], [0, 0, 1, 1], [], []>} : vector<8x128xf32>, vector<128x8xf32>, vector<8x8xf32> -> vector<8x8xf32>
    %c0_3 = arith.constant 0 : index
    %c0_4 = arith.constant 0 : index
    %4 = memref.load %arg1[%c0_3, %c0_4] : memref<1x1xf32, #tpu.memory_space<smem>>
    %5 = vector.broadcast %4 : f32 to vector<8x8xf32>
    %6 = arith.mulf %3, %5 : vector<8x8xf32>
    %c0_5 = arith.constant 0 : index
    %c0_6 = arith.constant 0 : index
    %7 = vector.load %arg4[%c0_5, %c0_6] : memref<8x1xi32, #tpu.memory_space<vmem>>, vector<8x1xi32>
    %c0_7 = arith.constant 0 : index
    %c0_8 = arith.constant 0 : index
    %8 = vector.load %arg5[%c0_7, %c0_8] : memref<1x8xi32, #tpu.memory_space<vmem>>, vector<1x8xi32>
    %9 = vector.broadcast %7 : vector<8x1xi32> to vector<8x8xi32>
    %10 = vector.broadcast %8 : vector<1x8xi32> to vector<8x8xi32>
    %11 = arith.cmpi eq, %9, %10 : vector<8x8xi32>
    %12 = tpu.iota {dimensions = array<i32: 1>} : vector<1x8xi32>
    %13 = tpu.iota {dimensions = array<i32: 0>} : vector<8x1xi32>
    %14 = vector.broadcast %0 : i32 to vector<8x1xi32>
    %15 = arith.addi %14, %13 : vector<8x1xi32>
    %16 = vector.broadcast %12 : vector<1x8xi32> to vector<8x8xi32>
    %17 = vector.broadcast %15 : vector<8x1xi32> to vector<8x8xi32>
    %18 = arith.cmpi ne, %16, %17 : vector<8x8xi32>
    %19 = arith.andi %11, %18 : vector<8x8xi1>
    %cst_9 = arith.constant 0x7F800000 : f32
    %20 = vector.broadcast %cst_9 : f32 to vector<8x8xf32>
    %21 = arith.select %19, %6, %20 : vector<8x8xi1>, vector<8x8xf32>
    %cst_10 = arith.constant dense<0x7F800000> : vector<8xf32>
    %22 = vector.multi_reduction <minimumf>, %21, %cst_10 [1] : vector<8x8xf32> to vector<8xf32>
    %23 = vector.shape_cast %22 : vector<8xf32> to vector<8x1xf32>
    %cst_11 = arith.constant 5.000000e-01 : f32
    %24 = vector.broadcast %cst_11 : f32 to vector<8x8xf32>
    %25 = arith.subf %6, %24 : vector<8x8xf32>
    %cst_12 = arith.constant -2.000000e+00 : f32
    %cst_13 = arith.constant 5.000000e+01 : f32
    %26 = vector.broadcast %cst_12 : f32 to vector<8x8xf32>
    %27 = vector.broadcast %cst_13 : f32 to vector<8x8xf32>
    %28 = arith.select %11, %26, %27 : vector<8x8xi1>, vector<8x8xf32>
    %29 = arith.mulf %25, %28 : vector<8x8xf32>
    %cst_14 = arith.constant 0.000000e+00 : f32
    %30 = vector.broadcast %cst_14 : f32 to vector<8x8xf32>
    %31 = arith.maximumf %29, %30 : vector<8x8xf32>
    %32 = math.absf %29 : vector<8x8xf32>
    %cst_15 = arith.constant 0.000000e+00 : f32
    %33 = vector.broadcast %cst_15 : f32 to vector<8x8xf32>
    %34 = arith.subf %33, %32 : vector<8x8xf32>
    %35 = math.exp %34 : vector<8x8xf32>
    %36 = math.log1p %35 : vector<8x8xf32>
    %37 = arith.addf %31, %36 : vector<8x8xf32>
    %cst_16 = arith.constant 0.000000e+00 : f32
    %38 = vector.broadcast %cst_16 : f32 to vector<8x8xf32>
    %39 = arith.select %19, %37, %38 : vector<8x8xi1>, vector<8x8xf32>
    %cst_17 = arith.constant dense<0.000000e+00> : vector<8xf32>
    %40 = vector.multi_reduction <add>, %39, %cst_17 [1] : vector<8x8xf32> to vector<8xf32>
    %41 = vector.shape_cast %40 : vector<8xf32> to vector<8x1xf32>
    %c0_18 = arith.constant 0 : index
    %c0_19 = arith.constant 0 : index
    %42 = vector.load %arg6[%c0_18, %c0_19] : memref<8x1xf32, #tpu.memory_space<vmem>>, vector<8x1xf32>
    %43 = arith.mulf %41, %42 : vector<8x1xf32>
    %cst_20 = arith.constant dense<true> : vector<8x8xi1>
    %44 = arith.xori %11, %cst_20 : vector<8x8xi1>
    %cst_21 = arith.constant 5.000000e-02 : f32
    %45 = vector.broadcast %cst_21 : f32 to vector<8x1xf32>
    %46 = arith.subf %23, %45 : vector<8x1xf32>
    %47 = vector.broadcast %46 : vector<8x1xf32> to vector<8x8xf32>
    %48 = arith.cmpf ogt, %6, %47 : vector<8x8xf32>
    %49 = arith.andi %44, %48 : vector<8x8xi1>
    %50 = arith.extui %49 : vector<8x8xi1> to vector<8x8xi32>
    %51 = arith.sitofp %50 : vector<8x8xi32> to vector<8x8xf32>
    %cst_22 = arith.constant dense<0.000000e+00> : vector<8xf32>
    %52 = vector.multi_reduction <add>, %51, %cst_22 [1] : vector<8x8xf32> to vector<8xf32>
    %53 = vector.shape_cast %52 : vector<8xf32> to vector<8x1xf32>
    %cst_23 = arith.constant 0.000000e+00 : f32
    %54 = vector.broadcast %cst_23 : f32 to vector<8x8xf32>
    %55 = arith.select %49, %37, %54 : vector<8x8xi1>, vector<8x8xf32>
    %cst_24 = arith.constant dense<0.000000e+00> : vector<8xf32>
    %56 = vector.multi_reduction <add>, %55, %cst_24 [1] : vector<8x8xf32> to vector<8xf32>
    %57 = vector.shape_cast %56 : vector<8xf32> to vector<8x1xf32>
    %cst_25 = arith.constant 0.000000e+00 : f32
    %58 = vector.broadcast %cst_25 : f32 to vector<8x1xf32>
    %59 = arith.cmpf ogt, %53, %58 : vector<8x1xf32>
    %cst_26 = arith.constant 4.000000e-02 : f32
    %60 = vector.broadcast %cst_26 : f32 to vector<8x1xf32>
    %61 = arith.mulf %60, %57 : vector<8x1xf32>
    %cst_27 = arith.constant 1.000000e+00 : f32
    %62 = vector.broadcast %cst_27 : f32 to vector<8x1xf32>
    %63 = arith.maximumf %53, %62 : vector<8x1xf32>
    %64 = arith.divf %61, %63 : vector<8x1xf32>
    %cst_28 = arith.constant 0.000000e+00 : f32
    %65 = vector.broadcast %cst_28 : f32 to vector<8x1xf32>
    %66 = arith.select %59, %64, %65 : vector<8x1xi1>, vector<8x1xf32>
    %67 = arith.addf %43, %66 : vector<8x1xf32>
    %c0_29 = arith.constant 0 : index
    %c0_30 = arith.constant 0 : index
    %68 = vector.load %arg7[%c0_29, %c0_30] : memref<8x1xf32, #tpu.memory_space<vmem>>, vector<8x1xf32>
    tpu.vector_store %arg7[%c0_29, %c0_30], %67 {strides = array<i32>} : memref<8x1xf32, #tpu.memory_space<vmem>>, vector<8x1xf32>,
    return
  }
  func.func @transform_0(%arg0: i32) -> (i32, i32) {
    %c0_i32 = arith.constant 0 : i32
    %c0_i32_0 = arith.constant 0 : i32
    %c0_i32_1 = arith.constant 0 : i32
    return %c0_i32, %c0_i32_0 : i32, i32
  }
  func.func @transform_1(%arg0: i32) -> (i32, i32) {
    %c0_i32 = arith.constant 0 : i32
    %c0_i32_0 = arith.constant 0 : i32
    return %arg0, %c0_i32 : i32, i32
  }
  func.func @transform_2(%arg0: i32) -> (i32, i32) {
    %c0_i32 = arith.constant 0 : i32
    %c0_i32_0 = arith.constant 0 : i32
    %c0_i32_1 = arith.constant 0 : i32
    return %c0_i32, %c0_i32_0 : i32, i32
  }
  func.func @transform_3(%arg0: i32) -> (i32, i32) {
    %c0_i32 = arith.constant 0 : i32
    %c0_i32_0 = arith.constant 0 : i32
    return %arg0, %c0_i32 : i32, i32
  }
  func.func @transform_4(%arg0: i32) -> (i32, i32) {
    %c0_i32 = arith.constant 0 : i32
    %c0_i32_0 = arith.constant 0 : i32
    %c0_i32_1 = arith.constant 0 : i32
    return %c0_i32, %c0_i32_0 : i32, i32
  }
  func.func @transform_5(%arg0: i32) -> (i32, i32) {
    %c0_i32 = arith.constant 0 : i32
    %c0_i32_0 = arith.constant 0 : i32
    return %arg0, %c0_i32 : i32, i32
  }
  func.func @transform_6(%arg0: i32) -> (i32, i32) {
    %c0_i32 = arith.constant 0 : i32
    %c0_i32_0 = arith.constant 0 : i32
    return %arg0, %c0_i32 : i32, i32
  }
}

</mosaic_0001>

<llo_original>
// kernel: tpu_custom_call.1
$region0: #{tpu_custom_call.1}
  #allocation0 [shape = 'u32[]', space=smem, size = 0x4, offset = 0x4, fixed_abs, tag = 'smem constant byte address 0x4 - core index']
  #allocation1 [shape = 'u32[144,128]{1,0:T(1,128)}', space=vmem, size = 0x12000, scoped, tag = 'internal scratch']
  #allocation2 [shape = 'f32[1,1]{1,0:T(1,128)S(6)}', space=smem, size = 0x200, scoped, tag = 'scoped memory for tpu_custom_call.1']
  %s0 = inlined_call_operand.<no memory space> [shape: f32[1,1], index: 0, kind: input, shape index: {}]
  %s1 = inlined_call_operand.vmem [shape: f32[8,128], index: 1, kind: input, shape index: {}]
  %s2 = inlined_call_operand.vmem [shape: f32[128,8], index: 2, kind: input, shape index: {}]
  %s3 = inlined_call_operand.vmem [shape: s32[8,1], index: 3, kind: input, shape index: {}]
  %s4 = inlined_call_operand.vmem [shape: s32[1,8], index: 4, kind: input, shape index: {}]
  %s5 = inlined_call_operand.vmem [shape: f32[8,1], index: 5, kind: input, shape index: {}]
  %s6 = inlined_call_operand.vmem [shape: f32[8,1], index: 6, kind: output, shape index: {}]
  %s7 = sld [smem:[#allocation0]]
  $region34: #{tpu_custom_call.1} parent=0
    _
  %s9 = ssub.s32 1, %s7
  %s10 = scalar_select 0, %s9, %s7
  %11 = sst [smem:[#allocation2]] %s0
  // Predicated region
  $region2: #{tpu_custom_call.1} parent=0 // pred_check
    _
  $region3: #{tpu_custom_call.1} parent=0 // pred_check_branch
    %13 = sbr.rel (0) target = $region5
  $region4: #{tpu_custom_call.1} parent=0 // pred_region
    _
  $region5: #{tpu_custom_call.1} parent=0 // pred_fallthru
    _
  // Predicated region
  $region6: #{tpu_custom_call.1} parent=0 // pred_check
    _
  $region7: #{tpu_custom_call.1} parent=0 // pred_check_branch
    %15 = sbr.rel (0) target = $region9
  $region8: #{tpu_custom_call.1} parent=0 // pred_region
    _
  $region9: #{tpu_custom_call.1} parent=0 // pred_fallthru
    _
  // Predicated region
  $region10: #{tpu_custom_call.1} parent=0 // pred_check
    _
  $region11: #{tpu_custom_call.1} parent=0 // pred_check_branch
    %17 = sbr.rel (0) target = $region13
  $region12: #{tpu_custom_call.1} parent=0 // pred_region
    _
  $region13: #{tpu_custom_call.1} parent=0 // pred_fallthru
    _
  // Predicated region
  $region14: #{tpu_custom_call.1} parent=0 // pred_check
    _
  $region15: #{tpu_custom_call.1} parent=0 // pred_check_branch
    %19 = sbr.rel (0) target = $region17
  $region16: #{tpu_custom_call.1} parent=0 // pred_region
    _
  $region17: #{tpu_custom_call.1} parent=0 // pred_fallthru
    _
  // Predicated region
  $region18: #{tpu_custom_call.1} parent=0 // pred_check
    _
  $region19: #{tpu_custom_call.1} parent=0 // pred_check_branch
    %21 = sbr.rel (0) target = $region21
  $region20: #{tpu_custom_call.1} parent=0 // pred_region
    _
  $region21: #{tpu_custom_call.1} parent=0 // pred_fallthru
    _
  // Predicated region
  $region22: #{tpu_custom_call.1} parent=0 // pred_check
    _
  $region23: #{tpu_custom_call.1} parent=0 // pred_check_branch
    %23 = sbr.rel (0) target = $region25
  $region24: #{tpu_custom_call.1} parent=0 // pred_region
    _
  $region25: #{tpu_custom_call.1} parent=0 // pred_fallthru
    _
  %s24 = smul.u32 0, 8
  %v25 = vld [vmem:[%s1] sm:$0xff]
  %v26 = vld [vmem:[%s2] sm:$0xff]
  %v27 = vld [vmem:[%s2 + $0x8] sm:$0xff]
  %v28 = vld [vmem:[%s2 + $0x10] sm:$0xff]
  %v29 = vld [vmem:[%s2 + $0x18] sm:$0xff]
  %v30 = vld [vmem:[%s2 + $0x20] sm:$0xff]
  %v31 = vld [vmem:[%s2 + $0x28] sm:$0xff]
  %v32 = vld [vmem:[%s2 + $0x30] sm:$0xff]
  %v33 = vld [vmem:[%s2 + $0x38] sm:$0xff]
  %v34 = vld [vmem:[%s2 + $0x40] sm:$0xff]
  %v35 = vld [vmem:[%s2 + $0x48] sm:$0xff]
  %v36 = vld [vmem:[%s2 + $0x50] sm:$0xff]
  %v37 = vld [vmem:[%s2 + $0x58] sm:$0xff]
  %v38 = vld [vmem:[%s2 + $0x60] sm:$0xff]
  %v39 = vld [vmem:[%s2 + $0x68] sm:$0xff]
  %v40 = vld [vmem:[%s2 + $0x70] sm:$0xff]
  %v41 = vld [vmem:[%s2 + $0x78] sm:$0xff]
  %42 = vmatprep.subr.mxu0 0.0
  %43 = vmatpush1.msra.mxu0 %v41
  %44 = vmatprep.subr.mxu0 0.0
  %45 = vmatpush1.msra.mxu0 %v40
  %46 = vmatprep.subr.mxu0 0.0
  %47 = vmatpush1.msra.mxu0 %v39
  %48 = vmatprep.subr.mxu0 0.0
  %49 = vmatpush1.msra.mxu0 %v38
  %50 = vmatprep.subr.mxu0 0.0
  %51 = vmatpush1.msra.mxu0 %v37
  %52 = vmatprep.subr.mxu0 0.0
  %53 = vmatpush1.msra.mxu0 %v36
  %54 = vmatprep.subr.mxu0 0.0
  %55 = vmatpush1.msra.mxu0 %v35
  %56 = vmatprep.subr.mxu0 0.0
  %57 = vmatpush1.msra.mxu0 %v34
  %58 = vmatprep.subr.mxu0 0.0
  %59 = vmatpush1.msra.mxu0 %v33
  %60 = vmatprep.subr.mxu0 0.0
  %61 = vmatpush1.msra.mxu0 %v32
  %62 = vmatprep.subr.mxu0 0.0
  %63 = vmatpush1.msra.mxu0 %v31
  %64 = vmatprep.subr.mxu0 0.0
  %65 = vmatpush1.msra.mxu0 %v30
  %66 = vmatprep.subr.mxu0 0.0
  %67 = vmatpush1.msra.mxu0 %v29
  %68 = vmatprep.subr.mxu0 0.0
  %69 = vmatpush1.msra.mxu0 %v28
  %70 = vmatprep.subr.mxu0 0.0
  %71 = vmatpush1.msra.mxu0 %v27
  %72 = vmatprep.subr.mxu0 0.0
  %73 = vmatpush1.msra.mxu0 %v26
  %74 = vmatprep.subr.mxu0 0.0
  %75 = vmatpush2.msra.mxu0 0.0
  %76 = vmatprep.subr.mxu0 0.0
  %77 = vmatpush2.msra.mxu0 0.0
  %78 = vmatprep.subr.mxu0 0.0
  %79 = vmatpush2.msra.mxu0 0.0
  %80 = vmatprep.subr.mxu0 0.0
  %81 = vmatpush2.msra.mxu0 0.0
  %82 = vmatprep.subr.mxu0 0.0
  %83 = vmatpush2.msra.mxu0 0.0
  %84 = vmatprep.subr.mxu0 0.0
  %85 = vmatpush2.msra.mxu0 0.0
  %86 = vmatprep.subr.mxu0 0.0
  %87 = vmatpush2.msra.mxu0 0.0
  %88 = vmatprep.subr.mxu0 0.0
  %89 = vmatpush2.msra.mxu0 0.0
  %90 = vmatprep.subr.mxu0 0.0
  %91 = vmatpush2.msra.mxu0 0.0
  %92 = vmatprep.subr.mxu0 0.0
  %93 = vmatpush2.msra.mxu0 0.0
  %94 = vmatprep.subr.mxu0 0.0
  %95 = vmatpush2.msra.mxu0 0.0
  %96 = vmatprep.subr.mxu0 0.0
  %97 = vmatpush2.msra.mxu0 0.0
  %98 = vmatprep.subr.mxu0 0.0
  %99 = vmatpush2.msra.mxu0 0.0
  %100 = vmatprep.subr.mxu0 0.0
  %101 = vmatpush2.msra.mxu0 0.0
  %102 = vmatprep.subr.mxu0 0.0
  %103 = vmatpush2.msra.mxu0 0.0
  %104 = vmatprep.subr.mxu0 0.0
  %105 = vmatpush2.msra.mxu0 0.0
  %106 = vmatprep.mubr.f32.mxu0 0.0
  %107 = vmatmul.mubr.f32.gmra.mxu0 %v25
  %v108 = vpop.f32.mrf.mxu0
  %v109 = vadd.f32 0.0, %v108
  %v110 = vpop.f32.mrf.mxu0
  %111 = vdwg.mxu0
  %s112 = sld [smem:[#allocation2]]
  %v113 = vstv %s112
  %v114 = vmul.f32 %v109, %v113
  %v115 = vld [vmem:[%s3] sm:$0xff]
  %v116 = vld [vmem:[%s4] sm:$0x1]
  %117 = vset.pattern.permute.xlu0 0
  %118 = vperm.xlu0 %117, %v115
  %v119 = vpop.permute.xlu0 %118
  %v120 = vlaneseq
  %v121 = vshrl.u32 %v120, 7
  %v122 = vsub.s32 0, %v121
  %v123 = vrot.slane %v116, %v122
  %vm124 = vcmp.eq.s32.totalorder %v119, %v123
  %v125 = vlaneseq
  %v126 = vand.u32 %v125, 127
  %v127 = vlaneseq
  %v128 = vshrl.u32 %v127, 7
  %v129 = vstv %s24
  %v130 = vadd.s32 %v129, %v128
  %vm131 = vcmp.ne.s32.totalorder %v126, %v130
  %vm132 = vmand %vm124, %vm131
  %v133 = vsel %vm132, %v114, inf
  %vm134 = vcmask 64512
  %v135 = vsel %vm134, %v133, inf
  %136 = vmin.xlane.f32.xlu0 %v135
  %v137 = vpop.xlane.xlu0 %136
  %v138 = vsub.f32 %v114, 0.5
  %v139 = vsel %vm124, -2.0, 50.0
  %v140 = vmul.f32 %v138, %v139
  %v141 = vmax.f32 %v140, 0.0
  %v142 = vand.u32 2147483647, %v140
  %v143 = vsub.f32 0.0, %v142
  %v144 = vmul.f32 %v143, 1.442695
  %v145 = vpow.pop %v144
  %v146 = vadd.f32 %v145, 1.0
  %v147 = vlog2.pop %v146
  %v148 = vmul.f32 %v147, 0.6931472
  %v149 = vmul.f32 -0.5, %v145
  %v150 = vadd.f32 %v149, 1.0
  %v151 = vmul.f32 %v150, %v145
  %v152 = vand.u32 2147483647, %v145
  %vm153 = vcmp.lt.f32.partialorder %v152, 0.0004427343
  %v154 = vsel %vm153, %v151, %v148
  %v155 = vadd.f32 %v141, %v154
  %v156 = vsel %vm132, %v155, 0.0
  %v157 = vsel %vm134, %v156, 0.0
  %158 = vadd.xlane.f32.xlu0 %v157
  %v159 = vpop.xlane.xlu0 %158
  %v160 = vld [vmem:[%s5] sm:$0xff]
  %v161 = vmul.f32 %v159, %v160
  %vm162 = vmxor %vm124, 1
  %v163 = vsub.f32 %v137, 0.05
  %vm164 = vcmp.gt.f32.partialorder %v114, %v163
  %vm165 = vmand %vm162, %vm164
  %v166 = vsel %vm165, 1, 0
  %v167 = vcvt.s32.f32 %v166
  %v168 = vsel %vm134, %v167, 0.0
  %169 = vadd.xlane.f32.xlu0 %v168
  %v170 = vpop.xlane.xlu0 %169
  %v171 = vsel %vm165, %v155, 0.0
  %v172 = vsel %vm134, %v171, 0.0
  %173 = vadd.xlane.f32.xlu0 %v172
  %v174 = vpop.xlane.xlu0 %173
  %vm175 = vcmp.gt.f32.partialorder %v170, 0.0
  %v176 = vmul.f32 %v174, 0.04
  %v177 = vmax.f32 %v170, 1.0
  %v178 = vrcp.pop %v177
  %v179 = vmul.f32 %v176, %v178
  %v180 = vsel %vm175, %v179, 0.0
  %v181 = vadd.f32 %v161, %v180
  %vm182 = vcmask 7168
  %183 = vst.msk [vmem:[%s6] sm:$0xff] %vm182, %v181
  // Predicated region
  $region26: #{tpu_custom_call.1} parent=0 // pred_check
    _
  $region27: #{tpu_custom_call.1} parent=0 // pred_check_branch
    %185 = sbr.rel (0) target = $region29
  $region28: #{tpu_custom_call.1} parent=0 // pred_region
    _
  $region29: #{tpu_custom_call.1} parent=0 // pred_fallthru
    _
  // Predicated region
  $region30: #{tpu_custom_call.1} parent=0 // pred_check
    _
  $region31: #{tpu_custom_call.1} parent=0 // pred_check_branch
    %187 = sbr.rel (0) target = $region33
  $region32: #{tpu_custom_call.1} parent=0 // pred_region
    _
  $region33: #{tpu_custom_call.1} parent=0 // pred_fallthru
    _

</llo_original>
